<compile_context>
chip_gen: v6e
topology: v6e:2x2x1
jax: 0.10.0
libtpu: 0.0.40
codegen_flags: <defaults>
</compile_context>

<pallas_src>
import jax
import jax.numpy as jnp
import numpy as np
from jax.experimental import pallas as pl
from jax.experimental.pallas import tpu as pltpu

# Problem constants (from the PyTorch module)
H_IN, W_IN = 56, 56
KSIZE = 3
DILATION = 2
PADDING = 1
STRIDE = 1
# output spatial size: floor((H + 2*pad - dil*(k-1) - 1)/stride + 1)
H_OUT = (H_IN + 2 * PADDING - DILATION * (KSIZE - 1) - 1) // STRIDE + 1  # 54
W_OUT = (W_IN + 2 * PADDING - DILATION * (KSIZE - 1) - 1) // STRIDE + 1  # 54

# Lane-dense / sublane-aligned on-chip plane.
P_H = 64
P_W = 128

# The roll-wraparound padding trick needs guaranteed-zero slack beyond the
# input on both axes (largest positive tap offset is +3, and the -1 offset
# wraps to the last row/column which must also be zero).
assert P_H % 8 == 0 and P_W % 128 == 0
assert P_H >= H_IN + 3 and P_W >= W_IN + 3, "zero halo required for roll-based padding"


def _conv_relu_sigmoid_kernel(w_ref, b_ref, x_ref, o_ref, p_ref):
    # w_ref: (9,)  f32 SMEM  (flattened 3x3 taps, w[3*dy + dx])
    # b_ref: (1,)  f32 SMEM
    # x_ref: (1, 1, 56, 56) f32 VMEM (raw NCHW input, N=C=1)
    # o_ref: (1, 1, 54, 54) f32 VMEM (final NCHW output; crop folded in)
    # p_ref: (P_H, P_W)     f32 VMEM scratch (input plane + zero halo)

    # Fused padding: zero only the slack around the 56x56 input (the slack,
    # together with roll wrap-around, supplies the padding=1 halo), then drop
    # the input plane at the aligned (0, 0) corner.
    p_ref[:, W_IN:] = jnp.zeros((P_H, P_W - W_IN), jnp.float32)
    p_ref[H_IN:, :W_IN] = jnp.zeros((P_H - H_IN, W_IN), jnp.float32)
    p_ref[:H_IN, :W_IN] = x_ref[0, 0]
    p = p_ref[...]

    # The dilated taps need offsets (d*DILATION - PADDING) in {-1, +1, +3} on
    # each axis.  Hoist the three lane (width) shifts once; pltpu.roll runs on
    # the XLU (otherwise idle here) and the wrapped-in lanes are zero, which is
    # exactly the padding=1 halo.
    lane_taps = [
        pltpu.roll(p, shift=(PADDING - dx * DILATION) % P_W, axis=1)
        for dx in range(KSIZE)
    ]

    # 9-tap conv as 3 row-combined planes (VPU MACs, scalar taps from SMEM)
    # + 3 sublane rolls (XLU).
    acc = jnp.full((P_H, P_W), b_ref[0], dtype=jnp.float32)
    for dy in range(KSIZE):
        row = (w_ref[3 * dy + 0] * lane_taps[0]
               + w_ref[3 * dy + 1] * lane_taps[1]
               + w_ref[3 * dy + 2] * lane_taps[2])
        acc = acc + pltpu.roll(row, shift=(PADDING - dy * DILATION) % P_H, axis=0)

    v = jnp.maximum(acc, 0.0)                       # relu (VPU)
    e = jnp.exp(-v)                                 # EUP
    sig = pl.reciprocal(1.0 + e, approx=False)      # sigmoid = 1/(1+exp(-v))

    # Crop to the valid 54x54 window and restore NCHW inside the kernel
    # (single masked store; removes the wrapper-side slice/reshape fusion).
    o_ref[0, 0] = sig[:H_OUT, :W_OUT]


@jax.jit
def model_forward(x_nchw, weight, bias):
    # x_nchw: (1, 1, 56, 56) f32; weight: (1, 1, 3, 3) f32; bias: (1,) f32.
    # The reshape/astype below are layout no-ops (already f32, contiguous);
    # there are no separate pre/post XLA fusions around the pallas_call.
    w_flat = weight.reshape(KSIZE * KSIZE).astype(jnp.float32)   # (9,) -> SMEM
    b = bias.astype(jnp.float32)                                 # (1,) -> SMEM

    return pl.pallas_call(
        _conv_relu_sigmoid_kernel,
        out_shape=jax.ShapeDtypeStruct((1, 1, H_OUT, W_OUT), jnp.float32),
        in_specs=[
            pl.BlockSpec(memory_space=pltpu.MemorySpace.SMEM),   # weights (scalars)
            pl.BlockSpec(memory_space=pltpu.MemorySpace.SMEM),   # bias (scalar)
            pl.BlockSpec(memory_space=pltpu.MemorySpace.VMEM),   # raw NCHW input plane
        ],
        out_specs=pl.BlockSpec(memory_space=pltpu.MemorySpace.VMEM),
        scratch_shapes=[pltpu.VMEM((P_H, P_W), jnp.float32)],
    )(w_flat, b, x_nchw)


def _reference(x_nchw, weight, bias):
    # Pure-JAX reference (lax conv) for a correctness sanity check.
    out = jax.lax.conv_general_dilated(
        x_nchw, weight,
        window_strides=(STRIDE, STRIDE),
        padding=((PADDING, PADDING), (PADDING, PADDING)),
        rhs_dilation=(DILATION, DILATION),
        dimension_numbers=("NCHW", "OIHW", "NCHW"),
    ) + bias.reshape(1, -1, 1, 1)
    return jax.nn.sigmoid(jnp.maximum(out, 0.0))


if __name__ == "__main__":
    key = jax.random.PRNGKey(0)
    kx, kw, kb = jax.random.split(key, 3)

    # Deterministic example input, same shape as the PyTorch script.
    x1 = jax.random.normal(kx, (1, 1, H_IN, W_IN), dtype=jnp.float32)

    # Deterministic parameter init (PyTorch Conv2d default: U(-sqrt(k), sqrt(k)),
    # k = 1 / (in_channels * kh * kw) = 1/9).
    bound = 1.0 / np.sqrt(1 * KSIZE * KSIZE)
    weight = jax.random.uniform(kw, (1, 1, KSIZE, KSIZE), jnp.float32, -bound, bound)
    bias = jax.random.uniform(kb, (1,), jnp.float32, -bound, bound)

    out = jax.block_until_ready(model_forward(x1, weight, bias))
    ref = jax.block_until_ready(_reference(x1, weight, bias))

    assert out.shape == (1, 1, H_OUT, W_OUT), out.shape
    np.testing.assert_allclose(np.asarray(out), np.asarray(ref), rtol=1e-5, atol=1e-5)

    print("KERNEL_OK")
</pallas_src>

<mosaic_0001>
module attributes {stable_mosaic.version = 11 : i64} {
  func.func @_conv_relu_sigmoid_kernel(%arg0: memref<9xf32, #tpu.memory_space<smem>>, %arg1: memref<1xf32, #tpu.memory_space<smem>>, %arg2: memref<1x1x56x56xf32, #tpu.memory_space<vmem>>, %arg3: memref<1x1x54x54xf32, #tpu.memory_space<vmem>>, %arg4: memref<64x128xf32, #tpu.memory_space<vmem>>) attributes {dimension_semantics = [], scalar_prefetch = 0 : i64, scratch_operands = 1 : i64, tpu.core_type = #tpu.core_type<tc>} {
    %cst = arith.constant 0.000000e+00 : f32
    %0 = vector.broadcast %cst : f32 to vector<64x72xf32>
    %c0 = arith.constant 0 : index
    %c56 = arith.constant 56 : index
    %1 = vector.load %arg4[%c0, %c56] : memref<64x128xf32, #tpu.memory_space<vmem>>, vector<64x72xf32>
    tpu.vector_store %arg4[%c0, %c56], %0 {strides = array<i32>} : memref<64x128xf32, #tpu.memory_space<vmem>>, vector<64x72xf32>,
    %cst_0 = arith.constant 0.000000e+00 : f32
    %2 = vector.broadcast %cst_0 : f32 to vector<8x56xf32>
    %c56_1 = arith.constant 56 : index
    %c0_2 = arith.constant 0 : index
    %3 = vector.load %arg4[%c56_1, %c0_2] : memref<64x128xf32, #tpu.memory_space<vmem>>, vector<8x56xf32>
    tpu.vector_store %arg4[%c56_1, %c0_2], %2 {strides = array<i32>} : memref<64x128xf32, #tpu.memory_space<vmem>>, vector<8x56xf32>,
    %c0_3 = arith.constant 0 : index
    %c0_4 = arith.constant 0 : index
    %c0_5 = arith.constant 0 : index
    %c0_6 = arith.constant 0 : index
    %4 = vector.load %arg2[%c0_3, %c0_4, %c0_5, %c0_6] : memref<1x1x56x56xf32, #tpu.memory_space<vmem>>, vector<1x1x56x56xf32>
    %5 = vector.shape_cast %4 : vector<1x1x56x56xf32> to vector<56x56xf32>
    %c0_7 = arith.constant 0 : index
    %c0_8 = arith.constant 0 : index
    %6 = vector.load %arg4[%c0_7, %c0_8] : memref<64x128xf32, #tpu.memory_space<vmem>>, vector<56x56xf32>
    tpu.vector_store %arg4[%c0_7, %c0_8], %5 {strides = array<i32>} : memref<64x128xf32, #tpu.memory_space<vmem>>, vector<56x56xf32>,
    %c0_9 = arith.constant 0 : index
    %c0_10 = arith.constant 0 : index
    %7 = vector.load %arg4[%c0_9, %c0_10] : memref<64x128xf32, #tpu.memory_space<vmem>>, vector<64x128xf32>
    %c1_i32 = arith.constant 1 : i32
    %8 = tpu.dynamic_rotate %7 by %c1_i32 dim 1 : vector<64x128xf32>, i32 -> vector<64x128xf32>
    %c127_i32 = arith.constant 127 : i32
    %9 = tpu.dynamic_rotate %7 by %c127_i32 dim 1 : vector<64x128xf32>, i32 -> vector<64x128xf32>
    %c125_i32 = arith.constant 125 : i32
    %10 = tpu.dynamic_rotate %7 by %c125_i32 dim 1 : vector<64x128xf32>, i32 -> vector<64x128xf32>
    %c0_11 = arith.constant 0 : index
    %11 = memref.load %arg1[%c0_11] : memref<1xf32, #tpu.memory_space<smem>>
    %12 = vector.broadcast %11 : f32 to vector<64x128xf32>
    %c0_12 = arith.constant 0 : index
    %13 = memref.load %arg0[%c0_12] : memref<9xf32, #tpu.memory_space<smem>>
    %14 = vector.broadcast %13 : f32 to vector<64x128xf32>
    %15 = arith.mulf %14, %8 : vector<64x128xf32>
    %c1 = arith.constant 1 : index
    %16 = memref.load %arg0[%c1] : memref<9xf32, #tpu.memory_space<smem>>
    %17 = vector.broadcast %16 : f32 to vector<64x128xf32>
    %18 = arith.mulf %17, %9 : vector<64x128xf32>
    %19 = arith.addf %15, %18 : vector<64x128xf32>
    %c2 = arith.constant 2 : index
    %20 = memref.load %arg0[%c2] : memref<9xf32, #tpu.memory_space<smem>>
    %21 = vector.broadcast %20 : f32 to vector<64x128xf32>
    %22 = arith.mulf %21, %10 : vector<64x128xf32>
    %23 = arith.addf %19, %22 : vector<64x128xf32>
    %c1_i32_13 = arith.constant 1 : i32
    %24 = tpu.dynamic_rotate %23 by %c1_i32_13 dim 0 : vector<64x128xf32>, i32 -> vector<64x128xf32>
    %25 = arith.addf %12, %24 : vector<64x128xf32>
    %c3 = arith.constant 3 : index
    %26 = memref.load %arg0[%c3] : memref<9xf32, #tpu.memory_space<smem>>
    %27 = vector.broadcast %26 : f32 to vector<64x128xf32>
    %28 = arith.mulf %27, %8 : vector<64x128xf32>
    %c4 = arith.constant 4 : index
    %29 = memref.load %arg0[%c4] : memref<9xf32, #tpu.memory_space<smem>>
    %30 = vector.broadcast %29 : f32 to vector<64x128xf32>
    %31 = arith.mulf %30, %9 : vector<64x128xf32>
    %32 = arith.addf %28, %31 : vector<64x128xf32>
    %c5 = arith.constant 5 : index
    %33 = memref.load %arg0[%c5] : memref<9xf32, #tpu.memory_space<smem>>
    %34 = vector.broadcast %33 : f32 to vector<64x128xf32>
    %35 = arith.mulf %34, %10 : vector<64x128xf32>
    %36 = arith.addf %32, %35 : vector<64x128xf32>
    %c63_i32 = arith.constant 63 : i32
    %37 = tpu.dynamic_rotate %36 by %c63_i32 dim 0 : vector<64x128xf32>, i32 -> vector<64x128xf32>
    %38 = arith.addf %25, %37 : vector<64x128xf32>
    %c6 = arith.constant 6 : index
    %39 = memref.load %arg0[%c6] : memref<9xf32, #tpu.memory_space<smem>>
    %40 = vector.broadcast %39 : f32 to vector<64x128xf32>
    %41 = arith.mulf %40, %8 : vector<64x128xf32>
    %c7 = arith.constant 7 : index
    %42 = memref.load %arg0[%c7] : memref<9xf32, #tpu.memory_space<smem>>
    %43 = vector.broadcast %42 : f32 to vector<64x128xf32>
    %44 = arith.mulf %43, %9 : vector<64x128xf32>
    %45 = arith.addf %41, %44 : vector<64x128xf32>
    %c8 = arith.constant 8 : index
    %46 = memref.load %arg0[%c8] : memref<9xf32, #tpu.memory_space<smem>>
    %47 = vector.broadcast %46 : f32 to vector<64x128xf32>
    %48 = arith.mulf %47, %10 : vector<64x128xf32>
    %49 = arith.addf %45, %48 : vector<64x128xf32>
    %c61_i32 = arith.constant 61 : i32
    %50 = tpu.dynamic_rotate %49 by %c61_i32 dim 0 : vector<64x128xf32>, i32 -> vector<64x128xf32>
    %51 = arith.addf %38, %50 : vector<64x128xf32>
    %cst_14 = arith.constant 0.000000e+00 : f32
    %52 = vector.broadcast %cst_14 : f32 to vector<64x128xf32>
    %53 = arith.maximumf %51, %52 : vector<64x128xf32>
    %cst_15 = arith.constant 0.000000e+00 : f32
    %54 = vector.broadcast %cst_15 : f32 to vector<64x128xf32>
    %55 = arith.subf %54, %53 : vector<64x128xf32>
    %56 = math.exp %55 : vector<64x128xf32>
    %cst_16 = arith.constant 1.000000e+00 : f32
    %57 = vector.broadcast %cst_16 : f32 to vector<64x128xf32>
    %58 = arith.addf %57, %56 : vector<64x128xf32>
    %59 = tpu.reciprocal %58 : vector<64x128xf32> -> vector<64x128xf32>
    %60 = vector.extract_strided_slice %59 {offsets = [0, 0], sizes = [54, 54], strides = [1, 1]} : vector<64x128xf32> to vector<54x54xf32>
    %c0_17 = arith.constant 0 : index
    %c0_18 = arith.constant 0 : index
    %c0_19 = arith.constant 0 : index
    %c0_20 = arith.constant 0 : index
    %61 = vector.load %arg3[%c0_17, %c0_18, %c0_19, %c0_20] : memref<1x1x54x54xf32, #tpu.memory_space<vmem>>, vector<1x1x54x54xf32>
    %62 = vector.shape_cast %61 : vector<1x1x54x54xf32> to vector<54x54xf32>
    %63 = vector.shape_cast %60 : vector<54x54xf32> to vector<1x1x54x54xf32>
    tpu.vector_store %arg3[%c0_17, %c0_18, %c0_19, %c0_20], %63 {strides = array<i32>} : memref<1x1x54x54xf32, #tpu.memory_space<vmem>>, vector<1x1x54x54xf32>,
    return
  }
}

</mosaic_0001>

<llo_original>
// kernel: model_forward.1
$region0: #{model_forward.1}
  #allocation0 [shape = 'u32[]', space=smem, size = 0x4, offset = 0x4, fixed_abs, tag = 'smem constant byte address 0x4 - core index']
  #allocation1 [shape = 'u32[144,128]{1,0:T(1,128)}', space=vmem, size = 0x12000, scoped, tag = 'internal scratch']
  #allocation2 [shape = 'f32[64,128]{1,0:T(8,128)}', space=vmem, size = 0x8000, scoped, tag = 'scratch operand']
  #allocation3 [shape = 'f32[1]{0:T(128)S(6)}', space=smem, size = 0x200, scoped, tag = 'scoped memory for model_forward.1']
  %s0 = inlined_call_operand.vmem [shape: f32[9], index: 0, kind: input, shape index: {}]
  %s1 = inlined_call_operand.<no memory space> [shape: f32[1], index: 1, kind: input, shape index: {}]
  %s2 = inlined_call_operand.hbm [shape: f32[1,1,56,56], index: 2, kind: input, shape index: {}]
  %s3 = inlined_call_operand.vmem [shape: f32[1,1,54,54], index: 3, kind: output, shape index: {}]
  %s4 = sld [smem:[#allocation0]]
  $region30: #{model_forward.1} parent=0
    _
  %s6 = ssub.s32 1, %s4
  %s7 = scalar_select 0, %s6, %s4
  %8 = sst [smem:[#allocation3]] %s1
  $region1: #{model_forward.1} parent=0
    #allocation4 [shape = 'u8[512]{0}', space=smem, size = 0x200, scoped, tag = 'input window, operand 0, single buffered']
    #allocation5 [shape = 's32[1]{0}', space=sflag, size = 0x4, scoped, tag = 'scoped memory for model_forward.1']
    #allocation6 [shape = 's32[1]{0}', space=sflag, size = 0x4, scoped, tag = 'scoped memory for model_forward.1']
    #allocation7 [shape = 'u8[28672]{0}', space=vmem, size = 0x7000, scoped, tag = 'input window, operand 2, single buffered']
    %9 = vsyncpa [#allocation6], 0
    %10 = vsyncpa [#allocation5], 0
    // Predicated region
    $region2: #{model_forward.1} parent=1 // pred_check
      _
    $region3: #{model_forward.1} parent=1 // pred_check_branch
      %12 = sbr.rel (0) target = $region5
    $region4: #{model_forward.1} parent=1 // pred_region
      %s14 = ssub.s32 16, 16
      %15 = vsyncadd [#allocation6], %s14
      %s17 = sshll.u32 %s0, 4
      %s18 = int_to_ptr.vmem [resolvable:$true] %s17
      %20 = dma.vmem_to_smem %s18, 16, [#allocation4], [#allocation6]
    $region5: #{model_forward.1} parent=1 // pred_fallthru
      _
    // Predicated region
    $region6: #{model_forward.1} parent=1 // pred_check
      _
    $region7: #{model_forward.1} parent=1 // pred_check_branch
      %22 = sbr.rel (0) target = $region9
    $region8: #{model_forward.1} parent=1 // pred_region
      _
    $region9: #{model_forward.1} parent=1 // pred_fallthru
      _
    // Predicated region
    $region10: #{model_forward.1} parent=1 // pred_check
      _
    $region11: #{model_forward.1} parent=1 // pred_check_branch
      %24 = sbr.rel (0) target = $region13
    $region12: #{model_forward.1} parent=1 // pred_region
      %s26 = ssub.s32 896, 896
      %27 = vsyncadd [#allocation5], %s26
      %s28 = sshll.u32 [#allocation7], 4
      %s29 = int_to_ptr.vmem [resolvable:$true] %s28
      %34 = dma.hbm_to_vmem [thread:$0]  %s2, 896, %s29, [#allocation5], 128, 128, 8
    $region13: #{model_forward.1} parent=1 // pred_fallthru
      _
    // Predicated region
    $region14: #{model_forward.1} parent=1 // pred_check
      _
    $region15: #{model_forward.1} parent=1 // pred_check_branch
      %36 = sbr.rel (0) target = $region17
    $region16: #{model_forward.1} parent=1 // pred_region
      %37 = dma.done [#allocation6], 16
    $region17: #{model_forward.1} parent=1 // pred_fallthru
      _
    // Predicated region
    $region18: #{model_forward.1} parent=1 // pred_check
      _
    $region19: #{model_forward.1} parent=1 // pred_check_branch
      %39 = sbr.rel (0) target = $region21
    $region20: #{model_forward.1} parent=1 // pred_region
      %40 = dma.done [#allocation5], 896
    $region21: #{model_forward.1} parent=1 // pred_fallthru
      _
    %41 = sfence
    %vm42 = vcmask 1048000
    %43 = vst.msk [vmem:[#allocation2] sm:$0xff] %vm42, 0.0
    %44 = vst.msk [vmem:[#allocation2 + $0x8] sm:$0xff] %vm42, 0.0
    %45 = vst.msk [vmem:[#allocation2 + $0x10] sm:$0xff] %vm42, 0.0
    %46 = vst.msk [vmem:[#allocation2 + $0x18] sm:$0xff] %vm42, 0.0
    %47 = vst.msk [vmem:[#allocation2 + $0x20] sm:$0xff] %vm42, 0.0
    %48 = vst.msk [vmem:[#allocation2 + $0x28] sm:$0xff] %vm42, 0.0
    %49 = vst.msk [vmem:[#allocation2 + $0x30] sm:$0xff] %vm42, 0.0
    %50 = vst.msk [vmem:[#allocation2 + $0x38] sm:$0xff] %vm42, 0.0
    %vm51 = vcmask 457728
    %52 = vst.msk [vmem:[#allocation2 + $0x38] sm:$0xff] %vm51, 0.0
    %v53 = vld [vmem:[#allocation7] sm:$0xff]
    %v54 = vld [vmem:[#allocation7 + $0x8] sm:$0xff]
    %v55 = vld [vmem:[#allocation7 + $0x10] sm:$0xff]
    %v56 = vld [vmem:[#allocation7 + $0x18] sm:$0xff]
    %v57 = vld [vmem:[#allocation7 + $0x20] sm:$0xff]
    %v58 = vld [vmem:[#allocation7 + $0x28] sm:$0xff]
    %v59 = vld [vmem:[#allocation7 + $0x30] sm:$0xff]
    %60 = vst.msk [vmem:[#allocation2] sm:$0xff] %vm51, %v53
    %61 = vst.msk [vmem:[#allocation2 + $0x8] sm:$0xff] %vm51, %v54
    %62 = vst.msk [vmem:[#allocation2 + $0x10] sm:$0xff] %vm51, %v55
    %63 = vst.msk [vmem:[#allocation2 + $0x18] sm:$0xff] %vm51, %v56
    %64 = vst.msk [vmem:[#allocation2 + $0x20] sm:$0xff] %vm51, %v57
    %65 = vst.msk [vmem:[#allocation2 + $0x28] sm:$0xff] %vm51, %v58
    %66 = vst.msk [vmem:[#allocation2 + $0x30] sm:$0xff] %vm51, %v59
    %v67 = vld [vmem:[#allocation2] sm:$0xff]
    %v68 = vld [vmem:[#allocation2 + $0x8] sm:$0xff]
    %v69 = vld [vmem:[#allocation2 + $0x10] sm:$0xff]
    %v70 = vld [vmem:[#allocation2 + $0x18] sm:$0xff]
    %v71 = vld [vmem:[#allocation2 + $0x20] sm:$0xff]
    %v72 = vld [vmem:[#allocation2 + $0x28] sm:$0xff]
    %v73 = vld [vmem:[#allocation2 + $0x30] sm:$0xff]
    %v74 = vld [vmem:[#allocation2 + $0x38] sm:$0xff]
    %75 = vrot.lane.b32.xlu0 %v67, 1
    %v76 = vpop.permute.xlu0 %75
    %77 = vrot.lane.b32.xlu0 %v68, 1
    %v78 = vpop.permute.xlu0 %77
    %79 = vrot.lane.b32.xlu0 %v69, 1
    %v80 = vpop.permute.xlu0 %79
    %81 = vrot.lane.b32.xlu0 %v70, 1
    %v82 = vpop.permute.xlu0 %81
    %83 = vrot.lane.b32.xlu0 %v71, 1
    %v84 = vpop.permute.xlu0 %83
    %85 = vrot.lane.b32.xlu0 %v72, 1
    %v86 = vpop.permute.xlu0 %85
    %87 = vrot.lane.b32.xlu0 %v73, 1
    %v88 = vpop.permute.xlu0 %87
    %89 = vrot.lane.b32.xlu0 %v74, 1
    %v90 = vpop.permute.xlu0 %89
    %91 = vrot.lane.b32.xlu0 %v67, 127
    %v92 = vpop.permute.xlu0 %91
    %93 = vrot.lane.b32.xlu0 %v68, 127
    %v94 = vpop.permute.xlu0 %93
    %95 = vrot.lane.b32.xlu0 %v69, 127
    %v96 = vpop.permute.xlu0 %95
    %97 = vrot.lane.b32.xlu0 %v70, 127
    %v98 = vpop.permute.xlu0 %97
    %99 = vrot.lane.b32.xlu0 %v71, 127
    %v100 = vpop.permute.xlu0 %99
    %101 = vrot.lane.b32.xlu0 %v72, 127
    %v102 = vpop.permute.xlu0 %101
    %103 = vrot.lane.b32.xlu0 %v73, 127
    %v104 = vpop.permute.xlu0 %103
    %105 = vrot.lane.b32.xlu0 %v74, 127
    %v106 = vpop.permute.xlu0 %105
    %107 = vrot.lane.b32.xlu0 %v67, 125
    %v108 = vpop.permute.xlu0 %107
    %109 = vrot.lane.b32.xlu0 %v68, 125
    %v110 = vpop.permute.xlu0 %109
    %111 = vrot.lane.b32.xlu0 %v69, 125
    %v112 = vpop.permute.xlu0 %111
    %113 = vrot.lane.b32.xlu0 %v70, 125
    %v114 = vpop.permute.xlu0 %113
    %115 = vrot.lane.b32.xlu0 %v71, 125
    %v116 = vpop.permute.xlu0 %115
    %117 = vrot.lane.b32.xlu0 %v72, 125
    %v118 = vpop.permute.xlu0 %117
    %119 = vrot.lane.b32.xlu0 %v73, 125
    %v120 = vpop.permute.xlu0 %119
    %121 = vrot.lane.b32.xlu0 %v74, 125
    %v122 = vpop.permute.xlu0 %121
    %s123 = sld [smem:[#allocation3]]
    %v124 = vstv %s123
    %s125 = sld [smem:[#allocation4]]
    %v126 = vstv %s125
    %v127 = vmul.f32 %v126, %v76
    %v128 = vmul.f32 %v126, %v78
    %v129 = vmul.f32 %v126, %v80
    %v130 = vmul.f32 %v126, %v82
    %v131 = vmul.f32 %v126, %v84
    %v132 = vmul.f32 %v126, %v86
    %v133 = vmul.f32 %v126, %v88
    %v134 = vmul.f32 %v126, %v90
    %s135 = sld [smem:[#allocation4 + $0x1]]
    %v136 = vstv %s135
    %v137 = vmul.f32 %v136, %v92
    %v138 = vmul.f32 %v136, %v94
    %v139 = vmul.f32 %v136, %v96
    %v140 = vmul.f32 %v136, %v98
    %v141 = vmul.f32 %v136, %v100
    %v142 = vmul.f32 %v136, %v102
    %v143 = vmul.f32 %v136, %v104
    %v144 = vmul.f32 %v136, %v106
    %v145 = vadd.f32 %v127, %v137
    %v146 = vadd.f32 %v128, %v138
    %v147 = vadd.f32 %v129, %v139
    %v148 = vadd.f32 %v130, %v140
    %v149 = vadd.f32 %v131, %v141
    %v150 = vadd.f32 %v132, %v142
    %v151 = vadd.f32 %v133, %v143
    %v152 = vadd.f32 %v134, %v144
    %s153 = sld [smem:[#allocation4 + $0x2]]
    %v154 = vstv %s153
    %v155 = vmul.f32 %v154, %v108
    %v156 = vmul.f32 %v154, %v110
    %v157 = vmul.f32 %v154, %v112
    %v158 = vmul.f32 %v154, %v114
    %v159 = vmul.f32 %v154, %v116
    %v160 = vmul.f32 %v154, %v118
    %v161 = vmul.f32 %v154, %v120
    %v162 = vmul.f32 %v154, %v122
    %v163 = vadd.f32 %v145, %v155
    %v164 = vadd.f32 %v146, %v156
    %v165 = vadd.f32 %v147, %v157
    %v166 = vadd.f32 %v148, %v158
    %v167 = vadd.f32 %v149, %v159
    %v168 = vadd.f32 %v150, %v160
    %v169 = vadd.f32 %v151, %v161
    %v170 = vadd.f32 %v152, %v162
    %v171 = vrot.slane %v163, 7
    %v172 = vrot.slane %v164, 7
    %v173 = vrot.slane %v165, 7
    %v174 = vrot.slane %v166, 7
    %v175 = vrot.slane %v167, 7
    %v176 = vrot.slane %v168, 7
    %v177 = vrot.slane %v169, 7
    %v178 = vrot.slane %v170, 7
    %v179 = vlaneseq
    %v180 = vshrl.u32 %v179, 7
    %vm181 = vcmp.lt.s32.totalorder %v180, 1
    %v182 = vsel %vm181, %v176, %v177
    %v183 = vsel %vm181, %v175, %v176
    %v184 = vsel %vm181, %v174, %v175
    %v185 = vsel %vm181, %v173, %v174
    %v186 = vsel %vm181, %v172, %v173
    %v187 = vsel %vm181, %v171, %v172
    %v188 = vsel %vm181, %v178, %v171
    %v189 = vadd.f32 %v124, %v188
    %v190 = vadd.f32 %v124, %v187
    %v191 = vadd.f32 %v124, %v186
    %v192 = vadd.f32 %v124, %v185
    %v193 = vadd.f32 %v124, %v184
    %v194 = vadd.f32 %v124, %v183
    %v195 = vadd.f32 %v124, %v182
    %s196 = sld [smem:[#allocation4 + $0x3]]
    %v197 = vstv %s196
    %v198 = vmul.f32 %v197, %v76
    %v199 = vmul.f32 %v197, %v78
    %v200 = vmul.f32 %v197, %v80
    %v201 = vmul.f32 %v197, %v82
    %v202 = vmul.f32 %v197, %v84
    %v203 = vmul.f32 %v197, %v86
    %v204 = vmul.f32 %v197, %v88
    %v205 = vmul.f32 %v197, %v90
    %s206 = sld [smem:[#allocation4 + $0x4]]
    %v207 = vstv %s206
    %v208 = vmul.f32 %v207, %v92
    %v209 = vmul.f32 %v207, %v94
    %v210 = vmul.f32 %v207, %v96
    %v211 = vmul.f32 %v207, %v98
    %v212 = vmul.f32 %v207, %v100
    %v213 = vmul.f32 %v207, %v102
    %v214 = vmul.f32 %v207, %v104
    %v215 = vmul.f32 %v207, %v106
    %v216 = vadd.f32 %v198, %v208
    %v217 = vadd.f32 %v199, %v209
    %v218 = vadd.f32 %v200, %v210
    %v219 = vadd.f32 %v201, %v211
    %v220 = vadd.f32 %v202, %v212
    %v221 = vadd.f32 %v203, %v213
    %v222 = vadd.f32 %v204, %v214
    %v223 = vadd.f32 %v205, %v215
    %s224 = sld [smem:[#allocation4 + $0x5]]
    %v225 = vstv %s224
    %v226 = vmul.f32 %v225, %v108
    %v227 = vmul.f32 %v225, %v110
    %v228 = vmul.f32 %v225, %v112
    %v229 = vmul.f32 %v225, %v114
    %v230 = vmul.f32 %v225, %v116
    %v231 = vmul.f32 %v225, %v118
    %v232 = vmul.f32 %v225, %v120
    %v233 = vmul.f32 %v225, %v122
    %v234 = vadd.f32 %v216, %v226
    %v235 = vadd.f32 %v217, %v227
    %v236 = vadd.f32 %v218, %v228
    %v237 = vadd.f32 %v219, %v229
    %v238 = vadd.f32 %v220, %v230
    %v239 = vadd.f32 %v221, %v231
    %v240 = vadd.f32 %v222, %v232
    %v241 = vadd.f32 %v223, %v233
    %v242 = vrot.slane %v234, 1
    %v243 = vrot.slane %v235, 1
    %v244 = vrot.slane %v236, 1
    %v245 = vrot.slane %v237, 1
    %v246 = vrot.slane %v238, 1
    %v247 = vrot.slane %v239, 1
    %v248 = vrot.slane %v240, 1
    %v249 = vrot.slane %v241, 1
    %vm250 = vcmp.lt.s32.totalorder %v180, 7
    %v251 = vsel %vm250, %v248, %v249
    %v252 = vsel %vm250, %v247, %v248
    %v253 = vsel %vm250, %v246, %v247
    %v254 = vsel %vm250, %v245, %v246
    %v255 = vsel %vm250, %v244, %v245
    %v256 = vsel %vm250, %v243, %v244
    %v257 = vsel %vm250, %v242, %v243
    %v258 = vadd.f32 %v189, %v257
    %v259 = vadd.f32 %v190, %v256
    %v260 = vadd.f32 %v191, %v255
    %v261 = vadd.f32 %v192, %v254
    %v262 = vadd.f32 %v193, %v253
    %v263 = vadd.f32 %v194, %v252
    %v264 = vadd.f32 %v195, %v251
    %s265 = sld [smem:[#allocation4 + $0x6]]
    %v266 = vstv %s265
    %v267 = vmul.f32 %v266, %v76
    %v268 = vmul.f32 %v266, %v78
    %v269 = vmul.f32 %v266, %v80
    %v270 = vmul.f32 %v266, %v82
    %v271 = vmul.f32 %v266, %v84
    %v272 = vmul.f32 %v266, %v86
    %v273 = vmul.f32 %v266, %v88
    %v274 = vmul.f32 %v266, %v90
    %s275 = sld [smem:[#allocation4 + $0x7]]
    %v276 = vstv %s275
    %v277 = vmul.f32 %v276, %v92
    %v278 = vmul.f32 %v276, %v94
    %v279 = vmul.f32 %v276, %v96
    %v280 = vmul.f32 %v276, %v98
    %v281 = vmul.f32 %v276, %v100
    %v282 = vmul.f32 %v276, %v102
    %v283 = vmul.f32 %v276, %v104
    %v284 = vmul.f32 %v276, %v106
    %v285 = vadd.f32 %v267, %v277
    %v286 = vadd.f32 %v268, %v278
    %v287 = vadd.f32 %v269, %v279
    %v288 = vadd.f32 %v270, %v280
    %v289 = vadd.f32 %v271, %v281
    %v290 = vadd.f32 %v272, %v282
    %v291 = vadd.f32 %v273, %v283
    %v292 = vadd.f32 %v274, %v284
    %s293 = sld [smem:[#allocation4 + $0x8]]
    %v294 = vstv %s293
    %v295 = vmul.f32 %v294, %v108
    %v296 = vmul.f32 %v294, %v110
    %v297 = vmul.f32 %v294, %v112
    %v298 = vmul.f32 %v294, %v114
    %v299 = vmul.f32 %v294, %v116
    %v300 = vmul.f32 %v294, %v118
    %v301 = vmul.f32 %v294, %v120
    %v302 = vmul.f32 %v294, %v122
    %v303 = vadd.f32 %v285, %v295
    %v304 = vadd.f32 %v286, %v296
    %v305 = vadd.f32 %v287, %v297
    %v306 = vadd.f32 %v288, %v298
    %v307 = vadd.f32 %v289, %v299
    %v308 = vadd.f32 %v290, %v300
    %v309 = vadd.f32 %v291, %v301
    %v310 = vadd.f32 %v292, %v302
    %v311 = vrot.slane %v303, 3
    %v312 = vrot.slane %v304, 3
    %v313 = vrot.slane %v305, 3
    %v314 = vrot.slane %v306, 3
    %v315 = vrot.slane %v307, 3
    %v316 = vrot.slane %v308, 3
    %v317 = vrot.slane %v309, 3
    %v318 = vrot.slane %v310, 3
    %vm319 = vcmp.lt.s32.totalorder %v180, 5
    %v320 = vsel %vm319, %v317, %v318
    %v321 = vsel %vm319, %v316, %v317
    %v322 = vsel %vm319, %v315, %v316
    %v323 = vsel %vm319, %v314, %v315
    %v324 = vsel %vm319, %v313, %v314
    %v325 = vsel %vm319, %v312, %v313
    %v326 = vsel %vm319, %v311, %v312
    %v327 = vadd.f32 %v258, %v326
    %v328 = vadd.f32 %v259, %v325
    %v329 = vadd.f32 %v260, %v324
    %v330 = vadd.f32 %v261, %v323
    %v331 = vadd.f32 %v262, %v322
    %v332 = vadd.f32 %v263, %v321
    %v333 = vadd.f32 %v264, %v320
    %v334 = vmax.f32 %v327, 0.0
    %v335 = vmax.f32 %v328, 0.0
    %v336 = vmax.f32 %v329, 0.0
    %v337 = vmax.f32 %v330, 0.0
    %v338 = vmax.f32 %v331, 0.0
    %v339 = vmax.f32 %v332, 0.0
    %v340 = vmax.f32 %v333, 0.0
    %v341 = vsub.f32 0.0, %v334
    %v342 = vsub.f32 0.0, %v335
    %v343 = vsub.f32 0.0, %v336
    %v344 = vsub.f32 0.0, %v337
    %v345 = vsub.f32 0.0, %v338
    %v346 = vsub.f32 0.0, %v339
    %v347 = vsub.f32 0.0, %v340
    %v348 = vmul.f32 %v341, 1.442695
    %v349 = vpow.pop %v348
    %v350 = vmul.f32 %v342, 1.442695
    %v351 = vpow.pop %v350
    %v352 = vmul.f32 %v343, 1.442695
    %v353 = vpow.pop %v352
    %v354 = vmul.f32 %v344, 1.442695
    %v355 = vpow.pop %v354
    %v356 = vmul.f32 %v345, 1.442695
    %v357 = vpow.pop %v356
    %v358 = vmul.f32 %v346, 1.442695
    %v359 = vpow.pop %v358
    %v360 = vmul.f32 %v347, 1.442695
    %v361 = vpow.pop %v360
    %v362 = vadd.f32 %v349, 1.0
    %v363 = vadd.f32 %v351, 1.0
    %v364 = vadd.f32 %v353, 1.0
    %v365 = vadd.f32 %v355, 1.0
    %v366 = vadd.f32 %v357, 1.0
    %v367 = vadd.f32 %v359, 1.0
    %v368 = vadd.f32 %v361, 1.0
    %v369 = vrcp.pop %v362
    %v370 = vrcp.pop %v363
    %v371 = vrcp.pop %v364
    %v372 = vrcp.pop %v365
    %v373 = vrcp.pop %v366
    %v374 = vrcp.pop %v367
    %v375 = vrcp.pop %v368
    %vm376 = vcmask 441344
    %377 = vst.msk [vmem:[%s3] sm:$0xff] %vm376, %v369
    %378 = vst.msk [vmem:[%s3 + $0x8] sm:$0xff] %vm376, %v370
    %379 = vst.msk [vmem:[%s3 + $0x10] sm:$0xff] %vm376, %v371
    %380 = vst.msk [vmem:[%s3 + $0x18] sm:$0xff] %vm376, %v372
    %381 = vst.msk [vmem:[%s3 + $0x20] sm:$0xff] %vm376, %v373
    %382 = vst.msk [vmem:[%s3 + $0x28] sm:$0xff] %vm376, %v374
    %vm383 = vcmask 439296
    %384 = vst.msk [vmem:[%s3 + $0x30] sm:$0x3f] %vm383, %v375
    // Predicated region
    $region22: #{model_forward.1} parent=1 // pred_check
      _
    $region23: #{model_forward.1} parent=1 // pred_check_branch
      %386 = sbr.rel (0) target = $region25
    $region24: #{model_forward.1} parent=1 // pred_region
      _
    $region25: #{model_forward.1} parent=1 // pred_fallthru
      _
    // Predicated region
    $region26: #{model_forward.1} parent=1 // pred_check
      _
    $region27: #{model_forward.1} parent=1 // pred_check_branch
      %388 = sbr.rel (0) target = $region29
    $region28: #{model_forward.1} parent=1 // pred_region
      _
    $region29: #{model_forward.1} parent=1 // pred_fallthru
      _
    %389 = vsyncpa [#allocation5], 1
    %390 = vsyncpa [#allocation6], 1

</llo_original>
